<compile_context>
chip_gen: v5e
topology: v5e:2x2
jax: 0.10.0
libtpu: 0.0.40
codegen_flags: <defaults>
</compile_context>

<pallas_src>
import functools

import jax
import jax.numpy as jnp
from jax.experimental import pallas as pl
from jax.experimental.pallas import tpu as pltpu

_LANE = 128
_SUBLANE = 8


def _round_up(x, m):
    return (x + m - 1) // m * m


# ---------------------------------------------------------------------------
# Kernel: fused MLP over one row-tile of the batch.
# refs layout: (x_ref, w0, b0, w1, b1, ..., wL-1, bL-1, o_ref)
# ---------------------------------------------------------------------------
def _mlp_kernel(x_ref, *refs, relu_flags):
    o_ref = refs[-1]
    param_refs = refs[:-1]
    h = x_ref[...]
    for li, apply_relu in enumerate(relu_flags):
        w = param_refs[2 * li][...]        # (K, M), compute dtype
        b = param_refs[2 * li + 1][...]    # (1, M), f32
        if apply_relu:
            # h is f32 here (output of previous layer's f32 epilogue).
            h = jnp.maximum(h, 0.0)
        acc = jnp.dot(h.astype(w.dtype), w, preferred_element_type=jnp.float32)
        h = acc + b                         # f32 epilogue
    o_ref[...] = h.astype(o_ref.dtype)


# ---------------------------------------------------------------------------
# Parameter init (matches nn.Linear: W is (out, in), U(-1/sqrt(fan_in), ...))
# ---------------------------------------------------------------------------
def init_mlp_params(key, input_dim, features, depth, num_outputs=None):
    def linear_init(k, fan_in, fan_out):
        kw, kb = jax.random.split(k)
        bound = 1.0 / jnp.sqrt(fan_in)
        w = jax.random.uniform(kw, (fan_out, fan_in), jnp.float32, -bound, bound)
        b = jax.random.uniform(kb, (fan_out,), jnp.float32, -bound, bound)
        return w, b

    keys = jax.random.split(key, depth + 2)
    params = {
        "first": linear_init(keys[0], input_dim, features),
        "layers": [linear_init(keys[1 + i], features, features) for i in range(depth)],
    }
    if num_outputs is not None:
        params["last"] = linear_init(keys[depth + 1], features, num_outputs)
    return params


# ---------------------------------------------------------------------------
# One-time parameter prep: transpose to (K, M), bias -> (1, M) f32, pad the
# final layer's output width to a lane multiple for dense stores.
# ---------------------------------------------------------------------------
def prepare_mlp_params(params, *, compute_dtype=jnp.float32):
    layers = [params["first"]] + list(params["layers"])
    has_last = "last" in params
    if has_last:
        layers.append(params["last"])

    # ReLU is applied to the *input* of every hidden layer (x = relu(x); x = layer(x)),
    # never before `first` or `last`.
    relu_flags = tuple(
        [False] + [True] * len(params["layers"]) + ([False] if has_last else [])
    )

    out_dim = layers[-1][0].shape[0]
    out_dim_padded = max(_LANE, _round_up(out_dim, _LANE))

    flat = []
    for idx, (w, b) in enumerate(layers):
        w_t = jnp.asarray(w, jnp.float32).T                  # (K, M)
        b_r = jnp.asarray(b, jnp.float32).reshape(1, -1)     # (1, M)
        if idx == len(layers) - 1 and out_dim_padded != out_dim:
            pad = out_dim_padded - out_dim
            w_t = jnp.pad(w_t, ((0, 0), (0, pad)))
            b_r = jnp.pad(b_r, ((0, 0), (0, pad)))
        flat.append(w_t.astype(compute_dtype))                # matmul operand dtype
        flat.append(b_r)                                      # bias stays f32
    return flat, relu_flags, out_dim, out_dim_padded


# ---------------------------------------------------------------------------
# Row-tile selection against a VMEM budget (weights resident + double-buffered
# input/output row tiles + f32 intermediates).
# ---------------------------------------------------------------------------
def _choose_row_tile(n_rows, in_dim, out_dim_padded, widths, itemsize,
                     budget_bytes=24 * 1024 * 1024, max_tile=1024):
    weight_bytes = 0
    k = in_dim
    for m in widths:
        weight_bytes += k * m * itemsize + m * 4
        k = m
    widest = max([in_dim] + list(widths))
    per_row = (2 * in_dim * itemsize          # double-buffered x tile
               + 2 * out_dim_padded * 4       # double-buffered out tile (f32)
               + 2 * widest * 4)              # live f32 intermediates
    avail = max(budget_bytes - weight_bytes, per_row * _SUBLANE)
    tile = int(avail // per_row)
    tile = max(_SUBLANE, min(max_tile, tile) // _SUBLANE * _SUBLANE)
    return min(tile, _round_up(n_rows, _SUBLANE))


# ---------------------------------------------------------------------------
# Forward pass: single fused pallas_call.
# ---------------------------------------------------------------------------
def mlp_forward(x, flat_params, relu_flags, input_dim, out_dim, out_dim_padded,
                *, compute_dtype=jnp.float32,
                vmem_budget_bytes=24 * 1024 * 1024):
    x = x.reshape(-1, input_dim).astype(compute_dtype)
    n = x.shape[0]

    num_layers = len(relu_flags)
    widths = [flat_params[2 * i].shape[1] for i in range(num_layers)]
    itemsize = jnp.dtype(compute_dtype).itemsize

    tn = _choose_row_tile(n, input_dim, out_dim_padded, widths, itemsize,
                          budget_bytes=vmem_budget_bytes)
    n_pad = _round_up(n, tn)
    if n_pad != n:
        x = jnp.pad(x, ((0, n_pad - n), (0, 0)))

    grid = (n_pad // tn,)

    in_specs = [pl.BlockSpec((tn, input_dim), lambda i: (i, 0))]
    for p in flat_params:  # weights/biases: full-array blocks, VMEM-resident
        in_specs.append(pl.BlockSpec(p.shape, lambda i: (0, 0)))
    out_specs = pl.BlockSpec((tn, out_dim_padded), lambda i: (i, 0))

    kernel = functools.partial(_mlp_kernel, relu_flags=relu_flags)

    out = pl.pallas_call(
        kernel,
        out_shape=jax.ShapeDtypeStruct((n_pad, out_dim_padded), jnp.float32),
        grid_spec=pl.GridSpec(grid=grid, in_specs=in_specs, out_specs=out_specs),
        compiler_params=pltpu.CompilerParams(
            dimension_semantics=("parallel",),      # megacore split on v7x
            vmem_limit_bytes=48 * 1024 * 1024,      # headroom, < 64 MiB (v7x physical)
        ),
    )(x, *flat_params)

    return out[:n, :out_dim]


# ---------------------------------------------------------------------------
if __name__ == "__main__":
    input_dim, features, depth, num_outputs, batch = 32, 128, 2, 16, 8

    key = jax.random.PRNGKey(0)
    k_params, k_x = jax.random.split(key)

    raw = init_mlp_params(k_params, input_dim, features, depth, num_outputs)
    x = jax.random.normal(k_x, (batch, input_dim), jnp.float32)

    # Plain-JAX reference (same semantics as the PyTorch module).
    ref = x.reshape(-1, input_dim)
    w, b = raw["first"]
    ref = ref @ w.T + b
    for (w, b) in raw["layers"]:
        ref = jnp.maximum(ref, 0.0) @ w.T + b
    w, b = raw["last"]
    ref = ref @ w.T + b

    # f32 fused kernel (strict check).
    flat, relu_flags, out_dim, out_dim_padded = prepare_mlp_params(
        raw, compute_dtype=jnp.float32)
    out = mlp_forward(x, flat, relu_flags, input_dim, out_dim, out_dim_padded)
    out = jax.block_until_ready(out)
    assert out.shape == (batch, num_outputs)
    assert jnp.allclose(out, ref, atol=1e-4, rtol=1e-4)

    # bf16 matmul operands (v6e/v7x MXU-friendly), f32 accumulation/epilogue.
    flat16, relu_flags16, od16, odp16 = prepare_mlp_params(
        raw, compute_dtype=jnp.bfloat16)
    out16 = mlp_forward(x, flat16, relu_flags16, input_dim, od16, odp16,
                        compute_dtype=jnp.bfloat16)
    out16 = jax.block_until_ready(out16)
    assert out16.shape == (batch, num_outputs)
    assert jnp.allclose(out16, ref, atol=1e-1, rtol=1e-1)

    print("KERNEL_OK")
</pallas_src>

<mosaic_0001>
module attributes {stable_mosaic.version = 11 : i64} {
  func.func @_mlp_kernel(%arg0: i32, %arg1: memref<8x32xf32, #tpu.memory_space<vmem>>, %arg2: memref<32x128xf32, #tpu.memory_space<vmem>>, %arg3: memref<1x128xf32, #tpu.memory_space<vmem>>, %arg4: memref<128x128xf32, #tpu.memory_space<vmem>>, %arg5: memref<1x128xf32, #tpu.memory_space<vmem>>, %arg6: memref<128x128xf32, #tpu.memory_space<vmem>>, %arg7: memref<1x128xf32, #tpu.memory_space<vmem>>, %arg8: memref<128x128xf32, #tpu.memory_space<vmem>>, %arg9: memref<1x128xf32, #tpu.memory_space<vmem>>, %arg10: memref<8x128xf32, #tpu.memory_space<vmem>>) attributes {dimension_semantics = [#tpu.dimension_semantics<parallel>], iteration_bounds = array<i64: 1>, scalar_prefetch = 0 : i64, scratch_operands = 0 : i64, tpu.core_type = #tpu.core_type<tc>, window_params = [{transform_indices = @transform_0, window_bounds = array<i64: 8, 32>}, {pipeline_mode = #tpu.pipeline_mode<synchronous>, transform_indices = @transform_1, window_bounds = array<i64: 32, 128>}, {pipeline_mode = #tpu.pipeline_mode<synchronous>, transform_indices = @transform_2, window_bounds = array<i64: 1, 128>}, {pipeline_mode = #tpu.pipeline_mode<synchronous>, transform_indices = @transform_3, window_bounds = array<i64: 128, 128>}, {pipeline_mode = #tpu.pipeline_mode<synchronous>, transform_indices = @transform_4, window_bounds = array<i64: 1, 128>}, {pipeline_mode = #tpu.pipeline_mode<synchronous>, transform_indices = @transform_5, window_bounds = array<i64: 128, 128>}, {pipeline_mode = #tpu.pipeline_mode<synchronous>, transform_indices = @transform_6, window_bounds = array<i64: 1, 128>}, {pipeline_mode = #tpu.pipeline_mode<synchronous>, transform_indices = @transform_7, window_bounds = array<i64: 128, 128>}, {pipeline_mode = #tpu.pipeline_mode<synchronous>, transform_indices = @transform_8, window_bounds = array<i64: 1, 128>}, {transform_indices = @transform_9, window_bounds = array<i64: 8, 128>}]} {
    %c0 = arith.constant 0 : index
    %c0_0 = arith.constant 0 : index
    %0 = vector.load %arg1[%c0, %c0_0] : memref<8x32xf32, #tpu.memory_space<vmem>>, vector<8x32xf32>
    %c0_1 = arith.constant 0 : index
    %c0_2 = arith.constant 0 : index
    %1 = vector.load %arg2[%c0_1, %c0_2] : memref<32x128xf32, #tpu.memory_space<vmem>>, vector<32x128xf32>
    %c0_3 = arith.constant 0 : index
    %c0_4 = arith.constant 0 : index
    %2 = vector.load %arg3[%c0_3, %c0_4] : memref<1x128xf32, #tpu.memory_space<vmem>>, vector<1x128xf32>
    %cst = arith.constant dense<0.000000e+00> : vector<8x128xf32>
    %3 = tpu.matmul %0, %1, %cst {dimension_numbers = #tpu.dot_dimension_numbers<[1], [0], [0], [1], [0, 0, 1, 1], [], []>} : vector<8x32xf32>, vector<32x128xf32>, vector<8x128xf32> -> vector<8x128xf32>
    %4 = vector.broadcast %2 : vector<1x128xf32> to vector<8x128xf32>
    %5 = arith.addf %3, %4 : vector<8x128xf32>
    %c0_5 = arith.constant 0 : index
    %c0_6 = arith.constant 0 : index
    %6 = vector.load %arg4[%c0_5, %c0_6] : memref<128x128xf32, #tpu.memory_space<vmem>>, vector<128x128xf32>
    %c0_7 = arith.constant 0 : index
    %c0_8 = arith.constant 0 : index
    %7 = vector.load %arg5[%c0_7, %c0_8] : memref<1x128xf32, #tpu.memory_space<vmem>>, vector<1x128xf32>
    %cst_9 = arith.constant 0.000000e+00 : f32
    %8 = vector.broadcast %cst_9 : f32 to vector<8x128xf32>
    %9 = arith.maximumf %5, %8 : vector<8x128xf32>
    %cst_10 = arith.constant dense<0.000000e+00> : vector<8x128xf32>
    %10 = tpu.matmul %9, %6, %cst_10 {dimension_numbers = #tpu.dot_dimension_numbers<[1], [0], [0], [1], [0, 0, 1, 1], [], []>} : vector<8x128xf32>, vector<128x128xf32>, vector<8x128xf32> -> vector<8x128xf32>
    %11 = vector.broadcast %7 : vector<1x128xf32> to vector<8x128xf32>
    %12 = arith.addf %10, %11 : vector<8x128xf32>
    %c0_11 = arith.constant 0 : index
    %c0_12 = arith.constant 0 : index
    %13 = vector.load %arg6[%c0_11, %c0_12] : memref<128x128xf32, #tpu.memory_space<vmem>>, vector<128x128xf32>
    %c0_13 = arith.constant 0 : index
    %c0_14 = arith.constant 0 : index
    %14 = vector.load %arg7[%c0_13, %c0_14] : memref<1x128xf32, #tpu.memory_space<vmem>>, vector<1x128xf32>
    %cst_15 = arith.constant 0.000000e+00 : f32
    %15 = vector.broadcast %cst_15 : f32 to vector<8x128xf32>
    %16 = arith.maximumf %12, %15 : vector<8x128xf32>
    %cst_16 = arith.constant dense<0.000000e+00> : vector<8x128xf32>
    %17 = tpu.matmul %16, %13, %cst_16 {dimension_numbers = #tpu.dot_dimension_numbers<[1], [0], [0], [1], [0, 0, 1, 1], [], []>} : vector<8x128xf32>, vector<128x128xf32>, vector<8x128xf32> -> vector<8x128xf32>
    %18 = vector.broadcast %14 : vector<1x128xf32> to vector<8x128xf32>
    %19 = arith.addf %17, %18 : vector<8x128xf32>
    %c0_17 = arith.constant 0 : index
    %c0_18 = arith.constant 0 : index
    %20 = vector.load %arg8[%c0_17, %c0_18] : memref<128x128xf32, #tpu.memory_space<vmem>>, vector<128x128xf32>
    %c0_19 = arith.constant 0 : index
    %c0_20 = arith.constant 0 : index
    %21 = vector.load %arg9[%c0_19, %c0_20] : memref<1x128xf32, #tpu.memory_space<vmem>>, vector<1x128xf32>
    %cst_21 = arith.constant dense<0.000000e+00> : vector<8x128xf32>
    %22 = tpu.matmul %19, %20, %cst_21 {dimension_numbers = #tpu.dot_dimension_numbers<[1], [0], [0], [1], [0, 0, 1, 1], [], []>} : vector<8x128xf32>, vector<128x128xf32>, vector<8x128xf32> -> vector<8x128xf32>
    %23 = vector.broadcast %21 : vector<1x128xf32> to vector<8x128xf32>
    %24 = arith.addf %22, %23 : vector<8x128xf32>
    %c0_22 = arith.constant 0 : index
    %c0_23 = arith.constant 0 : index
    %25 = vector.load %arg10[%c0_22, %c0_23] : memref<8x128xf32, #tpu.memory_space<vmem>>, vector<8x128xf32>
    tpu.vector_store %arg10[%c0_22, %c0_23], %24 {strides = array<i32>} : memref<8x128xf32, #tpu.memory_space<vmem>>, vector<8x128xf32>,
    return
  }
  func.func @transform_0(%arg0: i32) -> (i32, i32) {
    %c0_i32 = arith.constant 0 : i32
    %c0_i32_0 = arith.constant 0 : i32
    return %arg0, %c0_i32 : i32, i32
  }
  func.func @transform_1(%arg0: i32) -> (i32, i32) {
    %c0_i32 = arith.constant 0 : i32
    %c0_i32_0 = arith.constant 0 : i32
    %c0_i32_1 = arith.constant 0 : i32
    return %c0_i32, %c0_i32_0 : i32, i32
  }
  func.func @transform_2(%arg0: i32) -> (i32, i32) {
    %c0_i32 = arith.constant 0 : i32
    %c0_i32_0 = arith.constant 0 : i32
    %c0_i32_1 = arith.constant 0 : i32
    return %c0_i32, %c0_i32_0 : i32, i32
  }
  func.func @transform_3(%arg0: i32) -> (i32, i32) {
    %c0_i32 = arith.constant 0 : i32
    %c0_i32_0 = arith.constant 0 : i32
    %c0_i32_1 = arith.constant 0 : i32
    return %c0_i32, %c0_i32_0 : i32, i32
  }
  func.func @transform_4(%arg0: i32) -> (i32, i32) {
    %c0_i32 = arith.constant 0 : i32
    %c0_i32_0 = arith.constant 0 : i32
    %c0_i32_1 = arith.constant 0 : i32
    return %c0_i32, %c0_i32_0 : i32, i32
  }
  func.func @transform_5(%arg0: i32) -> (i32, i32) {
    %c0_i32 = arith.constant 0 : i32
    %c0_i32_0 = arith.constant 0 : i32
    %c0_i32_1 = arith.constant 0 : i32
    return %c0_i32, %c0_i32_0 : i32, i32
  }
  func.func @transform_6(%arg0: i32) -> (i32, i32) {
    %c0_i32 = arith.constant 0 : i32
    %c0_i32_0 = arith.constant 0 : i32
    %c0_i32_1 = arith.constant 0 : i32
    return %c0_i32, %c0_i32_0 : i32, i32
  }
  func.func @transform_7(%arg0: i32) -> (i32, i32) {
    %c0_i32 = arith.constant 0 : i32
    %c0_i32_0 = arith.constant 0 : i32
    %c0_i32_1 = arith.constant 0 : i32
    return %c0_i32, %c0_i32_0 : i32, i32
  }
  func.func @transform_8(%arg0: i32) -> (i32, i32) {
    %c0_i32 = arith.constant 0 : i32
    %c0_i32_0 = arith.constant 0 : i32
    %c0_i32_1 = arith.constant 0 : i32
    return %c0_i32, %c0_i32_0 : i32, i32
  }
  func.func @transform_9(%arg0: i32) -> (i32, i32) {
    %c0_i32 = arith.constant 0 : i32
    %c0_i32_0 = arith.constant 0 : i32
    return %arg0, %c0_i32 : i32, i32
  }
}

</mosaic_0001>

<llo_original>
// kernel: tpu_custom_call.1
$region0: #{tpu_custom_call.1}
  #allocation0 [shape = 'u32[]', space=smem, size = 0x4, offset = 0x4, fixed_abs, tag = 'smem constant byte address 0x4 - core index']
  #allocation1 [shape = 'u32[72,128]{1,0:T(1,128)}', space=vmem, size = 0x9000, scoped, tag = 'internal scratch']
  %s0 = inlined_call_operand.hbm [shape: f32[8,32], index: 0, kind: input, shape index: {}]
  %s1 = inlined_call_operand.hbm [shape: f32[32,128], index: 1, kind: input, shape index: {}]
  %s2 = inlined_call_operand.vmem [shape: f32[1,128], index: 2, kind: input, shape index: {}]
  %s3 = inlined_call_operand.hbm [shape: f32[128,128], index: 3, kind: input, shape index: {}]
  %s4 = inlined_call_operand.vmem [shape: f32[1,128], index: 4, kind: input, shape index: {}]
  %s5 = inlined_call_operand.hbm [shape: f32[128,128], index: 5, kind: input, shape index: {}]
  %s6 = inlined_call_operand.vmem [shape: f32[1,128], index: 6, kind: input, shape index: {}]
  %s7 = inlined_call_operand.hbm [shape: f32[128,128], index: 7, kind: input, shape index: {}]
  %s8 = inlined_call_operand.vmem [shape: f32[1,128], index: 8, kind: input, shape index: {}]
  %s9 = inlined_call_operand.hbm [shape: f32[8,128], index: 9, kind: output, shape index: {}]
  %s10 = sld [smem:[#allocation0]]
  $region66: #{tpu_custom_call.1} parent=0
    _
  %s12 = ssub.s32 1, %s10
  %s13 = scalar_select 0, %s12, %s10
  $region1: #{tpu_custom_call.1} parent=0
    #allocation2 [shape = 'u8[4096]{0}', space=vmem, size = 0x1000, scoped, tag = 'input window, operand 0, single buffered']
    #allocation3 [shape = 's32[1]{0}', space=sflag, size = 0x4, scoped, tag = 'scoped memory for tpu_custom_call.1']
    #allocation4 [shape = 's32[1]{0}', space=sflag, size = 0x4, scoped, tag = 'scoped memory for tpu_custom_call.1']
    #allocation5 [shape = 'u8[16384]{0}', space=vmem, size = 0x4000, scoped, tag = 'input window, operand 1, single buffered']
    #allocation6 [shape = 's32[1]{0}', space=sflag, size = 0x4, scoped, tag = 'scoped memory for tpu_custom_call.1']
    #allocation7 [shape = 'u8[65536]{0}', space=vmem, size = 0x10000, scoped, tag = 'input window, operand 3, single buffered']
    #allocation8 [shape = 'u8[65536]{0}', space=vmem, size = 0x10000, scoped, tag = 'input window, operand 5, single buffered']
    #allocation9 [shape = 's32[1]{0}', space=sflag, size = 0x4, scoped, tag = 'scoped memory for tpu_custom_call.1']
    #allocation10 [shape = 'u8[65536]{0}', space=vmem, size = 0x10000, scoped, tag = 'input window, operand 7, single buffered']
    #allocation11 [shape = 'u8[4096]{0}', space=vmem, size = 0x1000, scoped, tag = 'output window, operand 0, single buffered']
    %14 = vsyncpa [#allocation3], 0
    %15 = vsyncpa [#allocation6], 0
    %16 = vsyncpa [#allocation9], 0
    %17 = vsyncpa [#allocation4], 0
    // Predicated region
    $region2: #{tpu_custom_call.1} parent=1 // pred_check
      _
    $region3: #{tpu_custom_call.1} parent=1 // pred_check_branch
      %19 = sbr.rel (0) target = $region5
    $region4: #{tpu_custom_call.1} parent=1 // pred_region
      %21 = vsyncadd [#allocation3], 0
      %s23 = sshll.u32 %s0, 4
      %s24 = int_to_ptr.hbm [resolvable:$true] %s23
      %s25 = sshll.u32 [#allocation2], 4
      %s26 = int_to_ptr.vmem [resolvable:$true] %s25
      %28 = dma.hbm_to_vmem [thread:$0]  %s24, 128, %s26, [#allocation3]
    $region5: #{tpu_custom_call.1} parent=1 // pred_fallthru
      _
    // Predicated region
    $region6: #{tpu_custom_call.1} parent=1 // pred_check
      _
    $region7: #{tpu_custom_call.1} parent=1 // pred_check_branch
      %30 = sbr.rel (0) target = $region9
    $region8: #{tpu_custom_call.1} parent=1 // pred_region
      %32 = vsyncadd [#allocation6], 0
      %s33 = sshll.u32 %s1, 4
      %s34 = int_to_ptr.hbm [resolvable:$true] %s33
      %s35 = sshll.u32 [#allocation5], 4
      %s36 = int_to_ptr.vmem [resolvable:$true] %s35
      %41 = dma.hbm_to_vmem [thread:$0]  %s34, 512, %s36, [#allocation6], 128, 128, 8
    $region9: #{tpu_custom_call.1} parent=1 // pred_fallthru
      _
    // Predicated region
    $region10: #{tpu_custom_call.1} parent=1 // pred_check
      _
    $region11: #{tpu_custom_call.1} parent=1 // pred_check_branch
      %43 = sbr.rel (0) target = $region13
    $region12: #{tpu_custom_call.1} parent=1 // pred_region
      _
    $region13: #{tpu_custom_call.1} parent=1 // pred_fallthru
      _
    // Predicated region
    $region14: #{tpu_custom_call.1} parent=1 // pred_check
      _
    $region15: #{tpu_custom_call.1} parent=1 // pred_check_branch
      %45 = sbr.rel (0) target = $region17
    $region16: #{tpu_custom_call.1} parent=1 // pred_region
      %47 = vsyncadd [#allocation6], 0
      %s48 = sshll.u32 %s3, 4
      %s49 = int_to_ptr.hbm [resolvable:$true] %s48
      %s50 = sshll.u32 [#allocation7], 4
      %s51 = int_to_ptr.vmem [resolvable:$true] %s50
      %56 = dma.hbm_to_vmem [thread:$0]  %s49, 2048, %s51, [#allocation6], 128, 128, 8
    $region17: #{tpu_custom_call.1} parent=1 // pred_fallthru
      _
    // Predicated region
    $region18: #{tpu_custom_call.1} parent=1 // pred_check
      _
    $region19: #{tpu_custom_call.1} parent=1 // pred_check_branch
      %58 = sbr.rel (0) target = $region21
    $region20: #{tpu_custom_call.1} parent=1 // pred_region
      _
    $region21: #{tpu_custom_call.1} parent=1 // pred_fallthru
      _
    // Predicated region
    $region22: #{tpu_custom_call.1} parent=1 // pred_check
      _
    $region23: #{tpu_custom_call.1} parent=1 // pred_check_branch
      %60 = sbr.rel (0) target = $region25
    $region24: #{tpu_custom_call.1} parent=1 // pred_region
      %62 = vsyncadd [#allocation9], 0
      %s63 = sshll.u32 %s5, 4
      %s64 = int_to_ptr.hbm [resolvable:$true] %s63
      %s65 = sshll.u32 [#allocation8], 4
      %s66 = int_to_ptr.vmem [resolvable:$true] %s65
      %71 = dma.hbm_to_vmem [thread:$0]  %s64, 2048, %s66, [#allocation9], 128, 128, 8
    $region25: #{tpu_custom_call.1} parent=1 // pred_fallthru
      _
    // Predicated region
    $region26: #{tpu_custom_call.1} parent=1 // pred_check
      _
    $region27: #{tpu_custom_call.1} parent=1 // pred_check_branch
      %73 = sbr.rel (0) target = $region29
    $region28: #{tpu_custom_call.1} parent=1 // pred_region
      _
    $region29: #{tpu_custom_call.1} parent=1 // pred_fallthru
      _
    // Predicated region
    $region30: #{tpu_custom_call.1} parent=1 // pred_check
      _
    $region31: #{tpu_custom_call.1} parent=1 // pred_check_branch
      %75 = sbr.rel (0) target = $region33
    $region32: #{tpu_custom_call.1} parent=1 // pred_region
      %77 = vsyncadd [#allocation9], 0
      %s78 = sshll.u32 %s7, 4
      %s79 = int_to_ptr.hbm [resolvable:$true] %s78
      %s80 = sshll.u32 [#allocation10], 4
      %s81 = int_to_ptr.vmem [resolvable:$true] %s80
      %86 = dma.hbm_to_vmem [thread:$0]  %s79, 2048, %s81, [#allocation9], 128, 128, 8
    $region33: #{tpu_custom_call.1} parent=1 // pred_fallthru
      _
    // Predicated region
    $region34: #{tpu_custom_call.1} parent=1 // pred_check
      _
    $region35: #{tpu_custom_call.1} parent=1 // pred_check_branch
      %88 = sbr.rel (0) target = $region37
    $region36: #{tpu_custom_call.1} parent=1 // pred_region
      _
    $region37: #{tpu_custom_call.1} parent=1 // pred_fallthru
      _
    // Predicated region
    $region38: #{tpu_custom_call.1} parent=1 // pred_check
      _
    $region39: #{tpu_custom_call.1} parent=1 // pred_check_branch
      %90 = sbr.rel (0) target = $region41
    $region40: #{tpu_custom_call.1} parent=1 // pred_region
      %92 = dma.done [#allocation3], 128
    $region41: #{tpu_custom_call.1} parent=1 // pred_fallthru
      _
    // Predicated region
    $region42: #{tpu_custom_call.1} parent=1 // pred_check
      _
    $region43: #{tpu_custom_call.1} parent=1 // pred_check_branch
      %94 = sbr.rel (0) target = $region45
    $region44: #{tpu_custom_call.1} parent=1 // pred_region
      %96 = dma.done [#allocation6], 512
    $region45: #{tpu_custom_call.1} parent=1 // pred_fallthru
      _
    // Predicated region
    $region46: #{tpu_custom_call.1} parent=1 // pred_check
      _
    $region47: #{tpu_custom_call.1} parent=1 // pred_check_branch
      %98 = sbr.rel (0) target = $region49
    $region48: #{tpu_custom_call.1} parent=1 // pred_region
      %100 = dma.done [#allocation6], 2048
    $region49: #{tpu_custom_call.1} parent=1 // pred_fallthru
      _
    // Predicated region
    $region50: #{tpu_custom_call.1} parent=1 // pred_check
      _
    $region51: #{tpu_custom_call.1} parent=1 // pred_check_branch
      %102 = sbr.rel (0) target = $region53
    $region52: #{tpu_custom_call.1} parent=1 // pred_region
      %104 = dma.done [#allocation9], 2048
    $region53: #{tpu_custom_call.1} parent=1 // pred_fallthru
      _
    // Predicated region
    $region54: #{tpu_custom_call.1} parent=1 // pred_check
      _
    $region55: #{tpu_custom_call.1} parent=1 // pred_check_branch
      %106 = sbr.rel (0) target = $region57
    $region56: #{tpu_custom_call.1} parent=1 // pred_region
      %108 = dma.done [#allocation9], 2048
    $region57: #{tpu_custom_call.1} parent=1 // pred_fallthru
      _
    %v109 = vld [vmem:[#allocation2] sm:$0xff]
    %v110 = vld [vmem:[#allocation5] sm:$0xff]
    %v111 = vld [vmem:[#allocation5 + $0x8] sm:$0xff]
    %v112 = vld [vmem:[#allocation5 + $0x10] sm:$0xff]
    %v113 = vld [vmem:[#allocation5 + $0x18] sm:$0xff]
    %v114 = vld [vmem:[%s2] sm:$0x1]
    %v116 = vperm.slane %v114, 0
    %vm118 = vcmask 261120
    %v120 = vsel %vm118, %v109, 0
    %122 = vmatpush.msra.mxu0 0.0
    %123 = vmatpush.msra.mxu0 0.0
    %124 = vmatpush.msra.mxu0 0.0
    %125 = vmatpush.msra.mxu0 0.0
    %126 = vmatpush.msra.mxu0 0.0
    %127 = vmatpush.msra.mxu0 0.0
    %128 = vmatpush.msra.mxu0 0.0
    %129 = vmatpush.msra.mxu0 0.0
    %130 = vmatpush.msra.mxu0 0.0
    %131 = vmatpush.msra.mxu0 0.0
    %132 = vmatpush.msra.mxu0 0.0
    %133 = vmatpush.msra.mxu0 0.0
    %134 = vmatpush.msra.mxu0 %v113
    %135 = vmatpush.msra.mxu0 %v112
    %136 = vmatpush.msra.mxu0 %v111
    %137 = vmatpush.msra.mxu0 %v110
    %138 = vmatmul.f32.gmra.mxu0 %v120
    %v139 = vpop.f32.mrf.mxu0
    %v140 = vadd.f32 %v116, %v139
    %141 = vdwg.mxu0
    %v142 = vld [vmem:[#allocation7] sm:$0xff]
    %v143 = vld [vmem:[#allocation7 + $0x8] sm:$0xff]
    %v144 = vld [vmem:[#allocation7 + $0x10] sm:$0xff]
    %v145 = vld [vmem:[#allocation7 + $0x18] sm:$0xff]
    %v146 = vld [vmem:[#allocation7 + $0x20] sm:$0xff]
    %v147 = vld [vmem:[#allocation7 + $0x28] sm:$0xff]
    %v148 = vld [vmem:[#allocation7 + $0x30] sm:$0xff]
    %v149 = vld [vmem:[#allocation7 + $0x38] sm:$0xff]
    %v150 = vld [vmem:[#allocation7 + $0x40] sm:$0xff]
    %v151 = vld [vmem:[#allocation7 + $0x48] sm:$0xff]
    %v152 = vld [vmem:[#allocation7 + $0x50] sm:$0xff]
    %v153 = vld [vmem:[#allocation7 + $0x58] sm:$0xff]
    %v154 = vld [vmem:[#allocation7 + $0x60] sm:$0xff]
    %v155 = vld [vmem:[#allocation7 + $0x68] sm:$0xff]
    %v156 = vld [vmem:[#allocation7 + $0x70] sm:$0xff]
    %v157 = vld [vmem:[#allocation7 + $0x78] sm:$0xff]
    %v158 = vld [vmem:[%s4] sm:$0x1]
    %v159 = vmax.f32 %v140, 0.0
    %v161 = vperm.slane %v158, 0
    %163 = vmatpush.msra.mxu0 %v157
    %164 = vmatpush.msra.mxu0 %v156
    %165 = vmatpush.msra.mxu0 %v155
    %166 = vmatpush.msra.mxu0 %v154
    %167 = vmatpush.msra.mxu0 %v153
    %168 = vmatpush.msra.mxu0 %v152
    %169 = vmatpush.msra.mxu0 %v151
    %170 = vmatpush.msra.mxu0 %v150
    %171 = vmatpush.msra.mxu0 %v149
    %172 = vmatpush.msra.mxu0 %v148
    %173 = vmatpush.msra.mxu0 %v147
    %174 = vmatpush.msra.mxu0 %v146
    %175 = vmatpush.msra.mxu0 %v145
    %176 = vmatpush.msra.mxu0 %v144
    %177 = vmatpush.msra.mxu0 %v143
    %178 = vmatpush.msra.mxu0 %v142
    %179 = vmatmul.f32.gmra.mxu0 %v159
    %v180 = vpop.f32.mrf.mxu0
    %v181 = vadd.f32 %v161, %v180
    %182 = vdwg.mxu0
    %v183 = vld [vmem:[#allocation8] sm:$0xff]
    %v184 = vld [vmem:[#allocation8 + $0x8] sm:$0xff]
    %v185 = vld [vmem:[#allocation8 + $0x10] sm:$0xff]
    %v186 = vld [vmem:[#allocation8 + $0x18] sm:$0xff]
    %v187 = vld [vmem:[#allocation8 + $0x20] sm:$0xff]
    %v188 = vld [vmem:[#allocation8 + $0x28] sm:$0xff]
    %v189 = vld [vmem:[#allocation8 + $0x30] sm:$0xff]
    %v190 = vld [vmem:[#allocation8 + $0x38] sm:$0xff]
    %v191 = vld [vmem:[#allocation8 + $0x40] sm:$0xff]
    %v192 = vld [vmem:[#allocation8 + $0x48] sm:$0xff]
    %v193 = vld [vmem:[#allocation8 + $0x50] sm:$0xff]
    %v194 = vld [vmem:[#allocation8 + $0x58] sm:$0xff]
    %v195 = vld [vmem:[#allocation8 + $0x60] sm:$0xff]
    %v196 = vld [vmem:[#allocation8 + $0x68] sm:$0xff]
    %v197 = vld [vmem:[#allocation8 + $0x70] sm:$0xff]
    %v198 = vld [vmem:[#allocation8 + $0x78] sm:$0xff]
    %v199 = vld [vmem:[%s6] sm:$0x1]
    %v200 = vmax.f32 %v181, 0.0
    %v202 = vperm.slane %v199, 0
    %204 = vmatpush.msra.mxu0 %v198
    %205 = vmatpush.msra.mxu0 %v197
    %206 = vmatpush.msra.mxu0 %v196
    %207 = vmatpush.msra.mxu0 %v195
    %208 = vmatpush.msra.mxu0 %v194
    %209 = vmatpush.msra.mxu0 %v193
    %210 = vmatpush.msra.mxu0 %v192
    %211 = vmatpush.msra.mxu0 %v191
    %212 = vmatpush.msra.mxu0 %v190
    %213 = vmatpush.msra.mxu0 %v189
    %214 = vmatpush.msra.mxu0 %v188
    %215 = vmatpush.msra.mxu0 %v187
    %216 = vmatpush.msra.mxu0 %v186
    %217 = vmatpush.msra.mxu0 %v185
    %218 = vmatpush.msra.mxu0 %v184
    %219 = vmatpush.msra.mxu0 %v183
    %220 = vmatmul.f32.gmra.mxu0 %v200
    %v221 = vpop.f32.mrf.mxu0
    %v222 = vadd.f32 %v202, %v221
    %223 = vdwg.mxu0
    %v224 = vld [vmem:[#allocation10] sm:$0xff]
    %v225 = vld [vmem:[#allocation10 + $0x8] sm:$0xff]
    %v226 = vld [vmem:[#allocation10 + $0x10] sm:$0xff]
    %v227 = vld [vmem:[#allocation10 + $0x18] sm:$0xff]
    %v228 = vld [vmem:[#allocation10 + $0x20] sm:$0xff]
    %v229 = vld [vmem:[#allocation10 + $0x28] sm:$0xff]
    %v230 = vld [vmem:[#allocation10 + $0x30] sm:$0xff]
    %v231 = vld [vmem:[#allocation10 + $0x38] sm:$0xff]
    %v232 = vld [vmem:[#allocation10 + $0x40] sm:$0xff]
    %v233 = vld [vmem:[#allocation10 + $0x48] sm:$0xff]
    %v234 = vld [vmem:[#allocation10 + $0x50] sm:$0xff]
    %v235 = vld [vmem:[#allocation10 + $0x58] sm:$0xff]
    %v236 = vld [vmem:[#allocation10 + $0x60] sm:$0xff]
    %v237 = vld [vmem:[#allocation10 + $0x68] sm:$0xff]
    %v238 = vld [vmem:[#allocation10 + $0x70] sm:$0xff]
    %v239 = vld [vmem:[#allocation10 + $0x78] sm:$0xff]
    %v240 = vld [vmem:[%s8] sm:$0x1]
    %v242 = vperm.slane %v240, 0
    %244 = vmatpush.msra.mxu0 %v239
    %245 = vmatpush.msra.mxu0 %v238
    %246 = vmatpush.msra.mxu0 %v237
    %247 = vmatpush.msra.mxu0 %v236
    %248 = vmatpush.msra.mxu0 %v235
    %249 = vmatpush.msra.mxu0 %v234
    %250 = vmatpush.msra.mxu0 %v233
    %251 = vmatpush.msra.mxu0 %v232
    %252 = vmatpush.msra.mxu0 %v231
    %253 = vmatpush.msra.mxu0 %v230
    %254 = vmatpush.msra.mxu0 %v229
    %255 = vmatpush.msra.mxu0 %v228
    %256 = vmatpush.msra.mxu0 %v227
    %257 = vmatpush.msra.mxu0 %v226
    %258 = vmatpush.msra.mxu0 %v225
    %259 = vmatpush.msra.mxu0 %v224
    %260 = vmatmul.f32.gmra.mxu0 %v222
    %v261 = vpop.f32.mrf.mxu0
    %v262 = vadd.f32 %v242, %v261
    %263 = vdwg.mxu0
    %264 = vst [vmem:[#allocation11] sm:$0xff] %v262
    // Predicated region
    $region58: #{tpu_custom_call.1} parent=1 // pred_check
      _
    $region59: #{tpu_custom_call.1} parent=1 // pred_check_branch
      %266 = sbr.rel (0) target = $region61
    $region60: #{tpu_custom_call.1} parent=1 // pred_region
      %268 = vsyncadd [#allocation4], 0
      %s270 = sshll.u32 [#allocation11], 4
      %s271 = int_to_ptr.vmem [resolvable:$true] %s270
      %s272 = sshll.u32 %s9, 4
      %s273 = int_to_ptr.hbm [resolvable:$true] %s272
      %275 = dma.vmem_to_hbm [thread:$0]  %s271, 128, %s273, [#allocation4]
    $region61: #{tpu_custom_call.1} parent=1 // pred_fallthru
      _
    // Predicated region
    $region62: #{tpu_custom_call.1} parent=1 // pred_check
      _
    $region63: #{tpu_custom_call.1} parent=1 // pred_check_branch
      %277 = sbr.rel (0) target = $region65
    $region64: #{tpu_custom_call.1} parent=1 // pred_region
      %279 = dma.done [#allocation4], 128
    $region65: #{tpu_custom_call.1} parent=1 // pred_fallthru
      _
    %280 = vsyncpa [#allocation3], 1
    %281 = vsyncpa [#allocation6], 1
    %282 = vsyncpa [#allocation9], 1
    %283 = vsyncpa [#allocation4], 1

</llo_original>
